<compile_context>
chip_gen: v6e
topology: v6e:2x2x1
jax: 0.10.0
libtpu: 0.0.40
codegen_flags: <defaults>
</compile_context>

<pallas_src>
import jax
import jax.numpy as jnp
from jax.experimental import pallas as pl
from jax.experimental.pallas import tpu as pltpu


# ----------------------------------------------------------------------------
# Kernel: row-wise log_softmax over the last (lane) dimension.
# ----------------------------------------------------------------------------
def _log_softmax_kernel(x_ref, o_ref):
    # x_ref / o_ref: (tr, H) VMEM tiles; reduction is over the full lane axis,
    # so Mosaic masks any internal lane padding in the max / sum.
    x = x_ref[...].astype(jnp.float32)
    m = jnp.max(x, axis=-1, keepdims=True)
    s = x - m
    lse = jnp.log(jnp.sum(jnp.exp(s), axis=-1, keepdims=True))
    o_ref[...] = (s - lse).astype(o_ref.dtype)


def _choose_row_tile(n_rows, h, itemsize, target_block_bytes=4 * 1024 * 1024):
    """Row tile (multiple of 8): ~4 MiB blocks, >=2 grid steps when possible."""
    row_bytes = max(1, h * itemsize)
    tr = (target_block_bytes // row_bytes) // 8 * 8
    tr = max(8, min(2048, int(tr)))
    # Keep at least 2 grid steps when R allows: v7x has 2 TCs sharing the
    # "parallel" grid axis, and pipelining needs >1 step to overlap anything.
    if n_rows >= 16:
        half = (n_rows // 2) // 8 * 8
        if half >= 8:
            tr = min(tr, half)
    # Never exceed the row count rounded up to a sublane multiple.
    rows_pad8 = pl.cdiv(n_rows, 8) * 8
    return int(min(tr, rows_pad8))


def functional_log_softmax(x):
    """FunctionalModule(lambda x: F.log_softmax(x, dim=-1)) forward pass."""
    orig_shape = x.shape
    H = int(orig_shape[-1])
    R = 1
    for d in orig_shape[:-1]:
        R *= int(d)

    # Leading-dim merge only: metadata-level reshape, no HBM copy.
    x2 = x.reshape(R, H)

    itemsize = jnp.dtype(x.dtype).itemsize
    tr = _choose_row_tile(R, H, itemsize)
    grid = (pl.cdiv(R, tr),)

    # VMEM budget: double-buffered in + out blocks plus live f32 temporaries
    # (x, s, exp(s)) inside the kernel body.  Right-sized, small margin,
    # capped well under v7x's 64 MiB per-TC VMEM.
    block_bytes = tr * H * itemsize
    block_f32 = tr * H * 4
    vmem_needed = 4 * block_bytes + 3 * block_f32
    vmem_limit = int(min(40 * 1024 * 1024, vmem_needed + (4 << 20)))

    out = pl.pallas_call(
        _log_softmax_kernel,
        out_shape=jax.ShapeDtypeStruct((R, H), x.dtype),
        grid_spec=pltpu.PrefetchScalarGridSpec(
            num_scalar_prefetch=0,
            grid=grid,
            in_specs=[pl.BlockSpec((tr, H), lambda i: (i, 0))],
            out_specs=pl.BlockSpec((tr, H), lambda i: (i, 0)),
        ),
        compiler_params=pltpu.CompilerParams(
            dimension_semantics=("parallel",),
            vmem_limit_bytes=vmem_limit,
        ),
    )(x2)

    return out.reshape(orig_shape)


def functional_transpose_1_2(x):
    """FunctionalModule(lambda x: x.transpose(1, 2)) — pure layout glue."""
    # TODO(synk): when composed with a Pallas consumer/producer, fold this
    # permutation into that kernel's BlockSpec index_map (swap block indices)
    # instead of paying a standalone HBM round trip here.
    return jnp.swapaxes(x, 1, 2)


class FunctionalModule:
    """JAX mirror of the PyTorch FunctionalModule wrapper."""

    def __init__(self, functional):
        self.functional = functional

    def __call__(self, x):
        return self.functional(x)


if __name__ == "__main__":
    key = jax.random.PRNGKey(0)

    # Main (compute) functional: log_softmax over the last dim, in Pallas.
    B, T, H = 2, 8, 32
    x = jax.random.normal(key, (B, T, H), dtype=jnp.float32)
    mod = FunctionalModule(functional_log_softmax)
    out = jax.block_until_ready(mod(x))
    ref = jax.nn.log_softmax(x, axis=-1)
    assert out.shape == (B, T, H)
    assert out.dtype == x.dtype
    assert jnp.max(jnp.abs(out - ref)) < 1e-5

    # Second shape: non-128-multiple lane dim (50) and a partial tail row
    # block (R = 21 rows with tr = 8 -> grid of 3, last block masked).
    key2 = jax.random.PRNGKey(1)
    x2 = jax.random.normal(key2, (3, 7, 50), dtype=jnp.float32)
    out2 = jax.block_until_ready(mod(x2))
    ref2 = jax.nn.log_softmax(x2, axis=-1)
    assert out2.shape == x2.shape
    assert jnp.max(jnp.abs(out2 - ref2)) < 1e-5

    # Transpose variant (glue only).
    mod_t = FunctionalModule(functional_transpose_1_2)
    out_t = jax.block_until_ready(mod_t(x))
    assert out_t.shape == (B, H, T)

    print("KERNEL_OK")
</pallas_src>

<mosaic_0001>
module attributes {stable_mosaic.version = 11 : i64} {
  func.func @_log_softmax_kernel(%arg0: i32, %arg1: memref<8x32xf32, #tpu.memory_space<vmem>>, %arg2: memref<8x32xf32, #tpu.memory_space<vmem>>) attributes {dimension_semantics = [#tpu.dimension_semantics<parallel>], iteration_bounds = array<i64: 2>, scalar_prefetch = 0 : i64, scratch_operands = 0 : i64, tpu.core_type = #tpu.core_type<tc>, window_params = [{transform_indices = @transform_0, window_bounds = array<i64: 8, 32>}, {transform_indices = @transform_1, window_bounds = array<i64: 8, 32>}]} {
    %c0 = arith.constant 0 : index
    %c0_0 = arith.constant 0 : index
    %0 = vector.load %arg1[%c0, %c0_0] : memref<8x32xf32, #tpu.memory_space<vmem>>, vector<8x32xf32>
    %cst = arith.constant dense<0xFF800000> : vector<8xf32>
    %1 = vector.multi_reduction <maximumf>, %0, %cst [1] : vector<8x32xf32> to vector<8xf32>
    %2 = vector.shape_cast %1 : vector<8xf32> to vector<8x1xf32>
    %3 = vector.broadcast %2 : vector<8x1xf32> to vector<8x32xf32>
    %4 = arith.subf %0, %3 : vector<8x32xf32>
    %5 = math.exp %4 : vector<8x32xf32>
    %cst_1 = arith.constant dense<0.000000e+00> : vector<8xf32>
    %6 = vector.multi_reduction <add>, %5, %cst_1 [1] : vector<8x32xf32> to vector<8xf32>
    %7 = vector.shape_cast %6 : vector<8xf32> to vector<8x1xf32>
    %8 = math.log %7 : vector<8x1xf32>
    %9 = vector.broadcast %8 : vector<8x1xf32> to vector<8x32xf32>
    %10 = arith.subf %4, %9 : vector<8x32xf32>
    %c0_2 = arith.constant 0 : index
    %c0_3 = arith.constant 0 : index
    %11 = vector.load %arg2[%c0_2, %c0_3] : memref<8x32xf32, #tpu.memory_space<vmem>>, vector<8x32xf32>
    tpu.vector_store %arg2[%c0_2, %c0_3], %10 {strides = array<i32>} : memref<8x32xf32, #tpu.memory_space<vmem>>, vector<8x32xf32>,
    return
  }
  func.func @transform_0(%arg0: i32) -> (i32, i32) {
    %c0_i32 = arith.constant 0 : i32
    %c0_i32_0 = arith.constant 0 : i32
    return %arg0, %c0_i32 : i32, i32
  }
  func.func @transform_1(%arg0: i32) -> (i32, i32) {
    %c0_i32 = arith.constant 0 : i32
    %c0_i32_0 = arith.constant 0 : i32
    return %arg0, %c0_i32 : i32, i32
  }
}

</mosaic_0001>

<llo_original>
// kernel: tpu_custom_call.1
$region0: #{tpu_custom_call.1}
  #allocation0 [shape = 'u32[]', space=smem, size = 0x4, offset = 0x4, fixed_abs, tag = 'smem constant byte address 0x4 - core index']
  #allocation1 [shape = 'u32[144,128]{1,0:T(1,128)}', space=vmem, size = 0x12000, scoped, tag = 'internal scratch']
  %s0 = inlined_call_operand.hbm [shape: f32[16,32], index: 0, kind: input, shape index: {}]
  %s1 = inlined_call_operand.hbm [shape: f32[16,32], index: 1, kind: output, shape index: {}]
  %s2 = sld [smem:[#allocation0]]
  $region41: #{tpu_custom_call.1} parent=0
    _
  %s4 = ssub.s32 1, %s2
  %s5 = scalar_select 0, %s4, %s2
  $region1: #{tpu_custom_call.1} parent=0
    #allocation2 [shape = 'u8[8192]{0}', space=vmem, size = 0x2000, scoped, tag = 'input window, operand 0']
    #allocation3 [shape = 's32[2]{0}', space=sflag, size = 0x8, scoped, tag = 'scoped memory for tpu_custom_call.1']
    #allocation4 [shape = 's32[2]{0}', space=sflag, size = 0x8, scoped, tag = 'scoped memory for tpu_custom_call.1']
    #allocation5 [shape = 'u8[8192]{0}', space=vmem, size = 0x2000, scoped, tag = 'output window, operand 0']
    %6 = vsyncpa [#allocation3], 0
    %s7 = scalar_lea.sflag [#allocation3], 1
    %8 = vsyncpa %s7, 0
    %9 = vsyncpa [#allocation4], 0
    %s10 = scalar_lea.sflag [#allocation4], 1
    %11 = vsyncpa %s10, 0
    loop: start=0, step=1, limit=4
    $region2: #{tpu_custom_call.1} parent=1 // loop_pre_header
      _
    $region3: #{tpu_custom_call.1} parent=1 // loop_header
      %s13 = sphi 0, %s17
      %p14 = scmp.ge.s32.totalorder %s13, 4
      %s23 = sphi 0, %s25
      %s26 = sphi 0, %s23
      %s27 = sphi 0, %s26
      %s43 = sphi 0, %s27
      %s49 = sphi 0, %s51
      %s52 = sphi 0, %s49
      %s53 = sphi 0, %s52
      %s69 = sphi 0, %s53
    $region4: #{tpu_custom_call.1} parent=1 // loop_header_branch
      %16 = sbr.rel (%p14) target = $region8
    $region5: #{tpu_custom_call.1} parent=1 // loop_body
      %s18 = ssub.s32 %s13, 1
      %s19 = ssub.s32 %s13, 2
      %s20 = sadd.s32 %s13, 1
      %s21 = ssub.s32 %s13, %s20
      %p22 = scmp.eq.s32.totalorder %s21, 0
      %s24 = sadd.s32 %s23, 1
      %s25 = scalar_select %p22, %s23, %s24
      %p28 = pneg %p22
      %p29 = scmp.eq.s32.totalorder %s13, 1
      %p30 = por %p28, %p29
      %p31 = scmp.ne.s32.totalorder %s23, %s26
      %p32 = scmp.eq.s32.totalorder %s13, 0
      %p33 = por %p31, %p32
      %p34 = scmp.ne.s32.totalorder %s23, %s26
      %p35 = scmp.eq.s32.totalorder %s18, 1
      %p36 = por %p34, %p35
      %p37 = scmp.ne.s32.totalorder %s26, %s27
      %p38 = scmp.eq.s32.totalorder %s18, 0
      %p39 = por %p37, %p38
      %p40 = scmp.ne.s32.totalorder %s26, %s27
      %p41 = scmp.eq.s32.totalorder %s19, 1
      %p42 = por %p40, %p41
      %p44 = scmp.ne.s32.totalorder %s27, %s43
      %p45 = scmp.eq.s32.totalorder %s19, 0
      %p46 = por %p44, %p45
      %s47 = ssub.s32 %s13, %s20
      %p48 = scmp.eq.s32.totalorder %s47, 0
      %s50 = sadd.s32 %s49, 1
      %s51 = scalar_select %p48, %s49, %s50
      %p54 = pneg %p48
      %p55 = scmp.eq.s32.totalorder %s13, 1
      %p56 = por %p54, %p55
      %p57 = scmp.ne.s32.totalorder %s49, %s52
      %p58 = scmp.eq.s32.totalorder %s13, 0
      %p59 = por %p57, %p58
      %p60 = scmp.ne.s32.totalorder %s49, %s52
      %p61 = scmp.eq.s32.totalorder %s18, 1
      %p62 = por %p60, %p61
      %p63 = scmp.ne.s32.totalorder %s52, %s53
      %p64 = scmp.eq.s32.totalorder %s18, 0
      %p65 = por %p63, %p64
      %p66 = scmp.ne.s32.totalorder %s52, %s53
      %p67 = scmp.eq.s32.totalorder %s19, 1
      %p68 = por %p66, %p67
      %p70 = scmp.ne.s32.totalorder %s53, %s69
      %p71 = scmp.eq.s32.totalorder %s19, 0
      %p72 = por %p70, %p71
      %p73 = scmp.le.s32.totalorder 1, %s13
      %p74 = scmp.lt.s32.totalorder %s13, 3
      %p75 = pnand %p73, %p74
      %p76 = pneg %p75
      // Predicated region
      $region9: #{tpu_custom_call.1} parent=5 // pred_check
        _
      $region10: #{tpu_custom_call.1} parent=5 // pred_check_branch
        %78 = sbr.rel (%p75) target = $region12
      $region11: #{tpu_custom_call.1} parent=5 // pred_region
        %s79 = ssub.s32 %s13, 1
      $region12: #{tpu_custom_call.1} parent=5 // pred_fallthru
        _
      %p80 = scmp.lt.s32.totalorder %s13, 2
      // Predicated region
      $region13: #{tpu_custom_call.1} parent=5 // pred_check
        %p81 = pneg %p80
      $region14: #{tpu_custom_call.1} parent=5 // pred_check_branch
        %83 = sbr.rel (%p81) target = $region16
      $region15: #{tpu_custom_call.1} parent=5 // pred_region
        // Predicated region
        $region17: #{tpu_custom_call.1} parent=15 // pred_check
          %p84 = pneg %p33
        $region18: #{tpu_custom_call.1} parent=15 // pred_check_branch
          %86 = sbr.rel (%p84) target = $region20
        $region19: #{tpu_custom_call.1} parent=15 // pred_region
          %s87 = sand.u32 %s23, 1
          %s88 = scalar_lea.sflag [#allocation3], %s87
          %s89 = sand.u32 %s23, 1
          %s90 = smul.addr %s89, 8
          %s91 = scalar_lea.vmem [#allocation2], %s90
          %s93 = ssub.s32 128, 128
          %94 = vsyncadd %s88, %s93
          %s95 = smul.addr %s13, 128
          %s96 = scalar_lea.hbm %s0, %s95
          %s98 = sshll.u32 %s91, 4
          %s99 = int_to_ptr.vmem [resolvable:$true] %s98
          %101 = dma.hbm_to_vmem [thread:$0]  %s96, 128, %s99, %s88
        $region20: #{tpu_custom_call.1} parent=15 // pred_fallthru
          _
      $region16: #{tpu_custom_call.1} parent=5 // pred_fallthru
        _
      %p102 = scmp.le.s32.totalorder 1, %s13
      %p103 = scmp.lt.s32.totalorder %s13, 3
      %p104 = pnand %p102, %p103
      %p105 = pneg %p104
      // Predicated region
      $region21: #{tpu_custom_call.1} parent=5 // pred_check
        _
      $region22: #{tpu_custom_call.1} parent=5 // pred_check_branch
        %107 = sbr.rel (%p104) target = $region24
      $region23: #{tpu_custom_call.1} parent=5 // pred_region
        %s108 = ssub.s32 %s13, 1
        %s109 = sand.u32 %s26, 1
        %s110 = scalar_lea.sflag [#allocation3], %s109
        %s111 = sand.u32 %s26, 1
        %s112 = smul.addr %s111, 8
        %s113 = scalar_lea.vmem [#allocation2], %s112
        // Predicated region
        $region25: #{tpu_custom_call.1} parent=23 // pred_check
          %p114 = pneg %p39
        $region26: #{tpu_custom_call.1} parent=23 // pred_check_branch
          %116 = sbr.rel (%p114) target = $region28
        $region27: #{tpu_custom_call.1} parent=23 // pred_region
          %117 = dma.done %s110, 128
        $region28: #{tpu_custom_call.1} parent=23 // pred_fallthru
          _
        %s118 = sand.u32 %s26, 1
        %s119 = scalar_lea.sflag [#allocation3], %s118
        %s120 = sand.u32 %s26, 1
        %s121 = smul.addr %s120, 8
        %s122 = scalar_lea.vmem [#allocation2], %s121
        %p123 = pneg %p39
        %p124 = pneg %p36
        %p125 = pneg %p65
        %p126 = pneg %p62
        %s127 = sand.u32 %s52, 1
        %s128 = scalar_lea.sflag [#allocation4], %s127
        %s129 = sand.u32 %s52, 1
        %s130 = smul.addr %s129, 8
        %s131 = scalar_lea.vmem [#allocation5], %s130
        %v132 = vld [vmem:[%s113] sm:$0xff]
        %vm133 = vcmask 261120
        %v134 = vsel %vm133, %v132, -inf
        %135 = vmax.xlane.f32.xlu0 %v134
        %v136 = vpop.xlane.xlu0 %135
        %v137 = vsub.f32 %v132, %v136
        %v138 = vmul.f32 %v137, 1.442695
        %v139 = vpow.pop %v138
        %v140 = vsel %vm133, %v139, 0.0
        %141 = vadd.xlane.f32.xlu0 %v140
        %v142 = vpop.xlane.xlu0 %141
        %v143 = vlog2.pop %v142
        %v144 = vmul.f32 %v143, 0.6931472
        %v145 = vsub.f32 %v137, %v144
        %146 = vst.msk [vmem:[%s131] sm:$0xff] %vm133, %v145
        %s147 = sand.u32 %s52, 1
        %s148 = scalar_lea.sflag [#allocation4], %s147
        %s149 = sand.u32 %s52, 1
        %s150 = smul.addr %s149, 8
        %s151 = scalar_lea.vmem [#allocation5], %s150
        // Predicated region
        $region29: #{tpu_custom_call.1} parent=23 // pred_check
          %p152 = pneg %p62
        $region30: #{tpu_custom_call.1} parent=23 // pred_check_branch
          %154 = sbr.rel (%p152) target = $region32
        $region31: #{tpu_custom_call.1} parent=23 // pred_region
          %s156 = ssub.s32 128, 128
          %157 = vsyncadd %s148, %s156
          %s158 = smul.addr %s18, 128
          %s159 = scalar_lea.hbm %s1, %s158
          %s161 = sshll.u32 %s151, 4
          %s162 = int_to_ptr.vmem [resolvable:$true] %s161
          %164 = dma.vmem_to_hbm [thread:$0]  %s162, 128, %s159, %s148
        $region32: #{tpu_custom_call.1} parent=23 // pred_fallthru
          _
      $region24: #{tpu_custom_call.1} parent=5 // pred_fallthru
        _
      %p165 = scmp.le.s32.totalorder 2, %s13
      // Predicated region
      $region33: #{tpu_custom_call.1} parent=5 // pred_check
        %p166 = pneg %p165
      $region34: #{tpu_custom_call.1} parent=5 // pred_check_branch
        %168 = sbr.rel (%p166) target = $region36
      $region35: #{tpu_custom_call.1} parent=5 // pred_region
        %s169 = ssub.s32 %s13, 2
        // Predicated region
        $region37: #{tpu_custom_call.1} parent=35 // pred_check
          %p170 = pneg %p68
        $region38: #{tpu_custom_call.1} parent=35 // pred_check_branch
          %172 = sbr.rel (%p170) target = $region40
        $region39: #{tpu_custom_call.1} parent=35 // pred_region
          %s173 = sand.u32 %s53, 1
          %s174 = scalar_lea.sflag [#allocation4], %s173
          %s175 = sand.u32 %s53, 1
          %s176 = smul.addr %s175, 8
          %s177 = scalar_lea.vmem [#allocation5], %s176
          %178 = dma.done %s174, 128
        $region40: #{tpu_custom_call.1} parent=35 // pred_fallthru
          _
      $region36: #{tpu_custom_call.1} parent=5 // pred_fallthru
        _
    $region6: #{tpu_custom_call.1} parent=1 // loop_footer
      %s17 = sadd.s32 1, %s13
    $region7: #{tpu_custom_call.1} parent=1 // loop_footer_branch
      %12 = sbr.rel target = $region3
    $region8: #{tpu_custom_call.1} parent=1 // loop_exit
      _
    %179 = vsyncpa [#allocation3], 1
    %s180 = scalar_lea.sflag [#allocation3], 1
    %181 = vsyncpa %s180, 1
    %182 = vsyncpa [#allocation4], 1
    %s183 = scalar_lea.sflag [#allocation4], 1
    %184 = vsyncpa %s183, 1

</llo_original>
